<compile_context>
chip_gen: v7x
topology: tpu7x:2x2x1
jax: 0.10.0
libtpu: 0.0.40
codegen_flags: <defaults>
</compile_context>

<pallas_src>
import jax
import jax.numpy as jnp
import numpy as np
from jax.experimental import pallas as pl
from jax.experimental.pallas import tpu as pltpu


# ---------------------------------------------------------------------------
# helpers
# ---------------------------------------------------------------------------
def _largest_divisor_at_most(n, cap):
    cap = max(1, min(n, cap))
    for d in range(cap, 0, -1):
        if n % d == 0:
            return d
    return 1


def _vmem_capacity_bytes():
    """Per-core VMEM capacity; conservative (v7x = 64 MiB) fallback."""
    try:
        return int(pltpu.get_tpu_info().vmem_capacity_bytes)
    except Exception:
        return 64 * 1024 * 1024


def _vmem_limit(est_bytes, cap_bytes):
    # generous headroom over an inclusive estimate, never >80% of physical
    # VMEM (leave room for Mosaic internal scratch).
    hi = int(cap_bytes * 0.8)
    return int(min(hi, max(32 * 1024 * 1024, int(est_bytes * 1.5) + (4 << 20))))


def _idft_matrices(n, dtype):
    """Packed (3, n, n) ortho inverse-DFT matrices: [real, imag, real+imag].

    Phases use (j*k) mod n in exact integer arithmetic (then float64) so large
    n does not lose phase accuracy to float32 argument reduction.
    """
    idx = np.arange(n, dtype=np.int64)
    jk = np.outer(idx, idx) % n
    ph = 2.0 * np.pi * jk.astype(np.float64) / n
    fr = np.cos(ph) / np.sqrt(float(n))
    fi = np.sin(ph) / np.sqrt(float(n))   # +i sign: inverse DFT
    packed = np.stack([fr, fi, fr + fi]).astype(np.float32)
    return jnp.asarray(packed).astype(dtype)


# ---------------------------------------------------------------------------
# Kernel 1: temporal average of k-space
#   k_avg = sum_t(k0) / clamp(sum_t(mask), min=1)
# grid = (ns // s1  [parallel], nt // t1  [arbitrary, reduction])
# outputs are VMEM-resident accumulators across the temporal axis.
# ---------------------------------------------------------------------------
def _kavg_kernel(k0r_ref, k0i_ref, mr_ref, kar_ref, kai_ref, msum_ref):
    t = pl.program_id(1)

    @pl.when(t == 0)
    def _():
        kar_ref[...] = jnp.zeros_like(kar_ref)
        kai_ref[...] = jnp.zeros_like(kai_ref)
        msum_ref[...] = jnp.zeros_like(msum_ref)

    kar_ref[...] += jnp.sum(k0r_ref[...], axis=0)
    kai_ref[...] += jnp.sum(k0i_ref[...], axis=0)
    msum_ref[...] += jnp.sum(mr_ref[...], axis=0)

    @pl.when(t == pl.num_programs(1) - 1)
    def _():
        inv = 1.0 / jnp.maximum(msum_ref[...], 1.0)
        kar_ref[...] *= inv
        kai_ref[...] *= inv


# ---------------------------------------------------------------------------
# Kernel 2 (per frame t, per tile of coils):
#   k      = kavg + mask * (k0 - kavg)               (data consistency)
#   x_avg  = IDFT2(k)   (ortho, DFT-matrix matmuls, Gauss 3-mult)
#   Sx_avg += sum_coils( x_avg * conj(sensitivity) ) (coil combine)
# grid = (nt [parallel], ns // s_tile [arbitrary, reduction])
# ---------------------------------------------------------------------------
def _make_dc_ifft_kernel(s_tile, nx, ny, kavg_resident, mm_dtype):
    def kernel(kavg_r_ref, kavg_i_ref,
               k0r_ref, k0i_ref, mr_ref, sr_ref, si_ref,
               fx_ref, fy_ref,
               out_r_ref, out_i_ref,
               mre_ref, mim_ref):
        c = pl.program_id(1)
        base = c * s_tile if kavg_resident else 0

        fxr = fx_ref[0]
        fxi = fx_ref[1]
        fxs = fx_ref[2]

        # Phase 1: per-coil data consistency + IDFT along nx (Gauss 3-mult).
        # Per-coil ref slices keep live temporaries at single-plane size.
        for s in range(s_tile):
            m = mr_ref[0, s]
            kar = kavg_r_ref[base + s]
            kai = kavg_i_ref[base + s]
            kr = kar + m * (k0r_ref[0, s] - kar)   # == (1-m)*kavg + m*k0
            ki = kai + m * (k0i_ref[0, s] - kai)
            p1 = jnp.dot(fxr, kr.astype(mm_dtype),
                         preferred_element_type=jnp.float32)
            p2 = jnp.dot(fxi, ki.astype(mm_dtype),
                         preferred_element_type=jnp.float32)
            p3 = jnp.dot(fxs, (kr + ki).astype(mm_dtype),
                         preferred_element_type=jnp.float32)
            mre_ref[s] = p1 - p2
            mim_ref[s] = p3 - p1 - p2

        # Phase 2: IDFT along ny, batched over the whole coil tile:
        # 3 Gauss matmuls with M = s_tile*nx instead of 3 per coil.
        fyr = fy_ref[0]
        fyi = fy_ref[1]
        fys = fy_ref[2]
        mre = mre_ref[...].reshape(s_tile * nx, ny)
        mim = mim_ref[...].reshape(s_tile * nx, ny)
        q1 = jnp.dot(mre.astype(mm_dtype), fyr,
                     preferred_element_type=jnp.float32)
        q2 = jnp.dot(mim.astype(mm_dtype), fyi,
                     preferred_element_type=jnp.float32)
        q3 = jnp.dot((mre + mim).astype(mm_dtype), fys,
                     preferred_element_type=jnp.float32)
        x_re = (q1 - q2).reshape(s_tile, nx, ny)
        x_im = (q3 - q1 - q2).reshape(s_tile, nx, ny)

        # Phase 3: coil combine sum_s x_s * conj(S_s); per-coil ref slices.
        acc_re = jnp.zeros((nx, ny), jnp.float32)
        acc_im = jnp.zeros((nx, ny), jnp.float32)
        for s in range(s_tile):
            sre = sr_ref[0, s]
            sim = si_ref[0, s]
            acc_re = acc_re + x_re[s] * sre + x_im[s] * sim
            acc_im = acc_im + x_im[s] * sre - x_re[s] * sim

        @pl.when(c == 0)
        def _():
            out_r_ref[...] = jnp.zeros_like(out_r_ref)
            out_i_ref[...] = jnp.zeros_like(out_i_ref)

        out_r_ref[0] += acc_re
        out_i_ref[0] += acc_im

    return kernel


# ---------------------------------------------------------------------------
# Wrapper
# ---------------------------------------------------------------------------
def transform_data_in_xt_space_ta_mc(x, k0, mask, sensitivity,
                                     divide_by_n=False, norm=True,
                                     matmul_dtype=jnp.float32):
    del x, norm  # only matter on the divide_by_n branch
    # TODO(synk): divide_by_n=True branch (forward FFT of sensitivity-weighted
    # x) is not implemented in Pallas.
    assert not divide_by_n
    nt, ns, nx, ny, _ = k0.shape

    # One-time channel split. Imaginary mask channel dropped: the model always
    # duplicates the 2-D sampling mask across re/im.
    # TODO(synk): channel split + final stack are avoidable only with
    # channel-major storage upstream / un-interleaved outputs downstream.
    k0r, k0i = k0[..., 0], k0[..., 1]
    mr = mask[..., 0]
    sr, si = sensitivity[..., 0], sensitivity[..., 1]

    plane = nx * ny * 4
    cap = _vmem_capacity_bytes()

    # --- Kernel 1: temporal average of k-space -----------------------------
    # >=2 blocks along the parallel (coil) axis so both v7x cores stay busy.
    s1 = _largest_divisor_at_most(ns, min(8, max(1, ns // 2)))
    # HBM-BW-bound kernel: modest, budget-derived temporal tile is enough.
    budget1 = min(cap // 3, 24 << 20)
    t1 = _largest_divisor_at_most(
        nt, max(1, min(8, budget1 // (6 * s1 * plane))))
    est1 = (6 * t1 * s1 * plane      # 3 streams x double buffer
            + 4 * s1 * plane         # 2 resident outputs (x2 buffers)
            + s1 * plane)            # mask-sum scratch

    in_spec1 = pl.BlockSpec((t1, s1, nx, ny), lambda s, t: (t, s, 0, 0))
    out_spec1 = pl.BlockSpec((s1, nx, ny), lambda s, t: (s, 0, 0))

    kavg_r, kavg_i = pl.pallas_call(
        _kavg_kernel,
        out_shape=(jax.ShapeDtypeStruct((ns, nx, ny), jnp.float32),
                   jax.ShapeDtypeStruct((ns, nx, ny), jnp.float32)),
        grid_spec=pltpu.PrefetchScalarGridSpec(
            num_scalar_prefetch=0,
            grid=(ns // s1, nt // t1),
            in_specs=[in_spec1, in_spec1, in_spec1],
            out_specs=[out_spec1, out_spec1],
            scratch_shapes=[pltpu.VMEM((s1, nx, ny), jnp.float32)],
        ),
        compiler_params=pltpu.CompilerParams(
            dimension_semantics=("parallel", "arbitrary"),
            vmem_limit_bytes=_vmem_limit(est1, cap)),
    )(k0r, k0i, mr)

    # --- packed inverse-DFT matrices (host, exact phase) --------------------
    # matmul_dtype=jnp.bfloat16 halves matrix VMEM/HBM and hits the native MXU
    # rate, but does not meet the 1e-3 validation tolerance -> default f32.
    fx = _idft_matrices(nx, matmul_dtype)
    fy = _idft_matrices(ny, matmul_dtype)
    mat_dsize = jnp.dtype(matmul_dtype).itemsize
    mat_bytes = 2 * 3 * (nx * nx + ny * ny) * mat_dsize   # x2 double buffer

    # --- Kernel 2: data consistency + 2D IDFT + coil combine ----------------
    # Keep k_avg VMEM-resident only where it is cheap (large-VMEM parts);
    # otherwise stream it per coil tile (~+40% HBM reads but no VMEM blowup).
    kavg_resident = (4 * ns * plane) <= min(20 << 20, cap // 4)

    s_cap = 16 if cap >= (96 << 20) else 8
    budget2 = int(cap * 0.6)

    def _est2(st):
        b = 10 * st * plane                               # 5 streams x 2 buffers
        b += (4 * ns * plane) if kavg_resident else (4 * st * plane)  # k_avg
        b += 2 * st * plane                               # mre/mim scratch
        b += 6 * st * plane                               # q/x value temporaries
        b += mat_bytes + 4 * plane                        # matrices + outputs
        return b

    s_tile = _largest_divisor_at_most(ns, s_cap)
    while s_tile > 1 and _est2(s_tile) > budget2:
        s_tile = _largest_divisor_at_most(ns, s_tile - 1)
    est2 = _est2(s_tile)
    n_coil_blocks = ns // s_tile

    if kavg_resident:
        kavg_spec = pl.BlockSpec((ns, nx, ny), lambda t, c: (0, 0, 0))
    else:
        kavg_spec = pl.BlockSpec((s_tile, nx, ny), lambda t, c: (c, 0, 0))
    stream_spec = pl.BlockSpec((1, s_tile, nx, ny), lambda t, c: (t, c, 0, 0))
    fx_spec = pl.BlockSpec((3, nx, nx), lambda t, c: (0, 0, 0))
    fy_spec = pl.BlockSpec((3, ny, ny), lambda t, c: (0, 0, 0))
    out_spec = pl.BlockSpec((1, nx, ny), lambda t, c: (t, 0, 0))

    out_r, out_i = pl.pallas_call(
        _make_dc_ifft_kernel(s_tile, nx, ny, kavg_resident, matmul_dtype),
        out_shape=(jax.ShapeDtypeStruct((nt, nx, ny), jnp.float32),
                   jax.ShapeDtypeStruct((nt, nx, ny), jnp.float32)),
        grid_spec=pltpu.PrefetchScalarGridSpec(
            num_scalar_prefetch=0,
            grid=(nt, n_coil_blocks),
            in_specs=[kavg_spec, kavg_spec,
                      stream_spec, stream_spec, stream_spec,
                      stream_spec, stream_spec,
                      fx_spec, fy_spec],
            out_specs=[out_spec, out_spec],
            scratch_shapes=[pltpu.VMEM((s_tile, nx, ny), jnp.float32),
                            pltpu.VMEM((s_tile, nx, ny), jnp.float32)],
        ),
        compiler_params=pltpu.CompilerParams(
            dimension_semantics=("parallel", "arbitrary"),
            vmem_limit_bytes=_vmem_limit(est2, cap)),
    )(kavg_r, kavg_i, k0r, k0i, mr, sr, si, fx, fy)

    return jnp.stack([out_r, out_i], axis=-1)  # [nt, nx, ny, 2]


# ---------------------------------------------------------------------------
# Pure-JAX reference (same math as the PyTorch module, default flags)
# ---------------------------------------------------------------------------
def _reference(x, k0, mask, sensitivity):
    del x
    k_avg = jnp.sum(k0, axis=0) / jnp.maximum(jnp.sum(mask, axis=0), 1.0)
    k_avg = jnp.broadcast_to(k_avg, k0.shape)
    k = (1.0 - mask) * k_avg + mask * k0
    kc = k[..., 0] + 1j * k[..., 1]
    xc = jnp.fft.ifft2(kc, axes=(-2, -1), norm="ortho")
    sc = sensitivity[..., 0] - 1j * sensitivity[..., 1]  # conj(S)
    Sx = jnp.sum(xc * sc, axis=1)
    return jnp.stack([Sx.real, Sx.imag], axis=-1).astype(jnp.float32)


if __name__ == "__main__":
    nt, ns, nx, ny = 8, 4, 16, 16
    key = jax.random.PRNGKey(0)
    kx, kk, km, ks = jax.random.split(key, 4)

    x = jax.random.normal(kx, (nt, nx, ny, 2), dtype=jnp.float32)
    k0 = jax.random.normal(kk, (nt, ns, nx, ny, 2), dtype=jnp.float32)
    mask2d = (jax.random.uniform(km, (nt, ns, nx, ny)) > 0.5).astype(jnp.float32)
    mask = jnp.stack([mask2d, mask2d], axis=-1)  # same mask for re/im channels
    sensitivity = jax.random.normal(ks, (nt, ns, nx, ny, 2), dtype=jnp.float32)

    out = transform_data_in_xt_space_ta_mc(x, k0, mask, sensitivity)
    out = jax.block_until_ready(out)

    ref = _reference(x, k0, mask, sensitivity)
    np.testing.assert_allclose(np.asarray(out), np.asarray(ref),
                               rtol=1e-3, atol=1e-3)
    print("KERNEL_OK")
</pallas_src>

<mosaic_0001>
module attributes {stable_mosaic.version = 11 : i64} {
  func.func @_kavg_kernel(%arg0: i32, %arg1: i32, %arg2: memref<8x2x16x16xf32, #tpu.memory_space<vmem>>, %arg3: memref<8x2x16x16xf32, #tpu.memory_space<vmem>>, %arg4: memref<8x2x16x16xf32, #tpu.memory_space<vmem>>, %arg5: memref<2x16x16xf32, #tpu.memory_space<vmem>>, %arg6: memref<2x16x16xf32, #tpu.memory_space<vmem>>, %arg7: memref<2x16x16xf32, #tpu.memory_space<vmem>>) attributes {dimension_semantics = [#tpu.dimension_semantics<parallel>, #tpu.dimension_semantics<arbitrary>], iteration_bounds = array<i64: 2, 1>, scalar_prefetch = 0 : i64, scratch_operands = 1 : i64, tpu.core_type = #tpu.core_type<tc>, window_params = [{transform_indices = @transform_0, window_bounds = array<i64: 8, 2, 16, 16>}, {transform_indices = @transform_1, window_bounds = array<i64: 8, 2, 16, 16>}, {transform_indices = @transform_2, window_bounds = array<i64: 8, 2, 16, 16>}, {transform_indices = @transform_3, window_bounds = array<i64: 2, 16, 16>}, {transform_indices = @transform_4, window_bounds = array<i64: 2, 16, 16>}]} {
    %c0_i32 = arith.constant 0 : i32
    %0 = arith.cmpi eq, %arg1, %c0_i32 : i32
    %1 = arith.extui %0 : i1 to i32
    %c0_i32_0 = arith.constant 0 : i32
    %2 = arith.cmpi ne, %1, %c0_i32_0 : i32
    scf.if %2 {
      %cst_34 = arith.constant 0.000000e+00 : f32
      %21 = vector.broadcast %cst_34 : f32 to vector<2x16x16xf32>
      %c0_35 = arith.constant 0 : index
      %c0_36 = arith.constant 0 : index
      %c0_37 = arith.constant 0 : index
      %22 = vector.load %arg5[%c0_35, %c0_36, %c0_37] : memref<2x16x16xf32, #tpu.memory_space<vmem>>, vector<2x16x16xf32>
      tpu.vector_store %arg5[%c0_35, %c0_36, %c0_37], %21 {strides = array<i32>} : memref<2x16x16xf32, #tpu.memory_space<vmem>>, vector<2x16x16xf32>,
      %cst_38 = arith.constant 0.000000e+00 : f32
      %23 = vector.broadcast %cst_38 : f32 to vector<2x16x16xf32>
      %c0_39 = arith.constant 0 : index
      %c0_40 = arith.constant 0 : index
      %c0_41 = arith.constant 0 : index
      %24 = vector.load %arg6[%c0_39, %c0_40, %c0_41] : memref<2x16x16xf32, #tpu.memory_space<vmem>>, vector<2x16x16xf32>
      tpu.vector_store %arg6[%c0_39, %c0_40, %c0_41], %23 {strides = array<i32>} : memref<2x16x16xf32, #tpu.memory_space<vmem>>, vector<2x16x16xf32>,
      %cst_42 = arith.constant 0.000000e+00 : f32
      %25 = vector.broadcast %cst_42 : f32 to vector<2x16x16xf32>
      %c0_43 = arith.constant 0 : index
      %c0_44 = arith.constant 0 : index
      %c0_45 = arith.constant 0 : index
      %26 = vector.load %arg7[%c0_43, %c0_44, %c0_45] : memref<2x16x16xf32, #tpu.memory_space<vmem>>, vector<2x16x16xf32>
      tpu.vector_store %arg7[%c0_43, %c0_44, %c0_45], %25 {strides = array<i32>} : memref<2x16x16xf32, #tpu.memory_space<vmem>>, vector<2x16x16xf32>,
    } else {
    }
    %c0 = arith.constant 0 : index
    %c0_1 = arith.constant 0 : index
    %c0_2 = arith.constant 0 : index
    %3 = vector.load %arg5[%c0, %c0_1, %c0_2] : memref<2x16x16xf32, #tpu.memory_space<vmem>>, vector<2x16x16xf32>
    %c0_3 = arith.constant 0 : index
    %c0_4 = arith.constant 0 : index
    %c0_5 = arith.constant 0 : index
    %c0_6 = arith.constant 0 : index
    %4 = vector.load %arg2[%c0_3, %c0_4, %c0_5, %c0_6] : memref<8x2x16x16xf32, #tpu.memory_space<vmem>>, vector<8x2x16x16xf32>
    %cst = arith.constant dense<0.000000e+00> : vector<2x16x16xf32>
    %5 = vector.multi_reduction <add>, %4, %cst [0] : vector<8x2x16x16xf32> to vector<2x16x16xf32>
    %6 = arith.addf %3, %5 : vector<2x16x16xf32>
    %c0_7 = arith.constant 0 : index
    %c0_8 = arith.constant 0 : index
    %c0_9 = arith.constant 0 : index
    %7 = vector.load %arg5[%c0_7, %c0_8, %c0_9] : memref<2x16x16xf32, #tpu.memory_space<vmem>>, vector<2x16x16xf32>
    tpu.vector_store %arg5[%c0_7, %c0_8, %c0_9], %6 {strides = array<i32>} : memref<2x16x16xf32, #tpu.memory_space<vmem>>, vector<2x16x16xf32>,
    %c0_10 = arith.constant 0 : index
    %c0_11 = arith.constant 0 : index
    %c0_12 = arith.constant 0 : index
    %8 = vector.load %arg6[%c0_10, %c0_11, %c0_12] : memref<2x16x16xf32, #tpu.memory_space<vmem>>, vector<2x16x16xf32>
    %c0_13 = arith.constant 0 : index
    %c0_14 = arith.constant 0 : index
    %c0_15 = arith.constant 0 : index
    %c0_16 = arith.constant 0 : index
    %9 = vector.load %arg3[%c0_13, %c0_14, %c0_15, %c0_16] : memref<8x2x16x16xf32, #tpu.memory_space<vmem>>, vector<8x2x16x16xf32>
    %cst_17 = arith.constant dense<0.000000e+00> : vector<2x16x16xf32>
    %10 = vector.multi_reduction <add>, %9, %cst_17 [0] : vector<8x2x16x16xf32> to vector<2x16x16xf32>
    %11 = arith.addf %8, %10 : vector<2x16x16xf32>
    %c0_18 = arith.constant 0 : index
    %c0_19 = arith.constant 0 : index
    %c0_20 = arith.constant 0 : index
    %12 = vector.load %arg6[%c0_18, %c0_19, %c0_20] : memref<2x16x16xf32, #tpu.memory_space<vmem>>, vector<2x16x16xf32>
    tpu.vector_store %arg6[%c0_18, %c0_19, %c0_20], %11 {strides = array<i32>} : memref<2x16x16xf32, #tpu.memory_space<vmem>>, vector<2x16x16xf32>,
    %c0_21 = arith.constant 0 : index
    %c0_22 = arith.constant 0 : index
    %c0_23 = arith.constant 0 : index
    %13 = vector.load %arg7[%c0_21, %c0_22, %c0_23] : memref<2x16x16xf32, #tpu.memory_space<vmem>>, vector<2x16x16xf32>
    %c0_24 = arith.constant 0 : index
    %c0_25 = arith.constant 0 : index
    %c0_26 = arith.constant 0 : index
    %c0_27 = arith.constant 0 : index
    %14 = vector.load %arg4[%c0_24, %c0_25, %c0_26, %c0_27] : memref<8x2x16x16xf32, #tpu.memory_space<vmem>>, vector<8x2x16x16xf32>
    %cst_28 = arith.constant dense<0.000000e+00> : vector<2x16x16xf32>
    %15 = vector.multi_reduction <add>, %14, %cst_28 [0] : vector<8x2x16x16xf32> to vector<2x16x16xf32>
    %16 = arith.addf %13, %15 : vector<2x16x16xf32>
    %c0_29 = arith.constant 0 : index
    %c0_30 = arith.constant 0 : index
    %c0_31 = arith.constant 0 : index
    %17 = vector.load %arg7[%c0_29, %c0_30, %c0_31] : memref<2x16x16xf32, #tpu.memory_space<vmem>>, vector<2x16x16xf32>
    tpu.vector_store %arg7[%c0_29, %c0_30, %c0_31], %16 {strides = array<i32>} : memref<2x16x16xf32, #tpu.memory_space<vmem>>, vector<2x16x16xf32>,
    %c0_i32_32 = arith.constant 0 : i32
    %18 = arith.cmpi eq, %arg1, %c0_i32_32 : i32
    %19 = arith.extui %18 : i1 to i32
    %c0_i32_33 = arith.constant 0 : i32
    %20 = arith.cmpi ne, %19, %c0_i32_33 : i32
    scf.if %20 {
      %c0_34 = arith.constant 0 : index
      %c0_35 = arith.constant 0 : index
      %c0_36 = arith.constant 0 : index
      %21 = vector.load %arg7[%c0_34, %c0_35, %c0_36] : memref<2x16x16xf32, #tpu.memory_space<vmem>>, vector<2x16x16xf32>
      %cst_37 = arith.constant 1.000000e+00 : f32
      %22 = vector.broadcast %cst_37 : f32 to vector<2x16x16xf32>
      %23 = arith.maximumf %21, %22 : vector<2x16x16xf32>
      %cst_38 = arith.constant 1.000000e+00 : f32
      %24 = vector.broadcast %cst_38 : f32 to vector<2x16x16xf32>
      %25 = arith.divf %24, %23 : vector<2x16x16xf32>
      %c0_39 = arith.constant 0 : index
      %c0_40 = arith.constant 0 : index
      %c0_41 = arith.constant 0 : index
      %26 = vector.load %arg5[%c0_39, %c0_40, %c0_41] : memref<2x16x16xf32, #tpu.memory_space<vmem>>, vector<2x16x16xf32>
      %27 = arith.mulf %26, %25 : vector<2x16x16xf32>
      %c0_42 = arith.constant 0 : index
      %c0_43 = arith.constant 0 : index
      %c0_44 = arith.constant 0 : index
      %28 = vector.load %arg5[%c0_42, %c0_43, %c0_44] : memref<2x16x16xf32, #tpu.memory_space<vmem>>, vector<2x16x16xf32>
      tpu.vector_store %arg5[%c0_42, %c0_43, %c0_44], %27 {strides = array<i32>} : memref<2x16x16xf32, #tpu.memory_space<vmem>>, vector<2x16x16xf32>,
      %c0_45 = arith.constant 0 : index
      %c0_46 = arith.constant 0 : index
      %c0_47 = arith.constant 0 : index
      %29 = vector.load %arg6[%c0_45, %c0_46, %c0_47] : memref<2x16x16xf32, #tpu.memory_space<vmem>>, vector<2x16x16xf32>
      %30 = arith.mulf %29, %25 : vector<2x16x16xf32>
      %c0_48 = arith.constant 0 : index
      %c0_49 = arith.constant 0 : index
      %c0_50 = arith.constant 0 : index
      %31 = vector.load %arg6[%c0_48, %c0_49, %c0_50] : memref<2x16x16xf32, #tpu.memory_space<vmem>>, vector<2x16x16xf32>
      tpu.vector_store %arg6[%c0_48, %c0_49, %c0_50], %30 {strides = array<i32>} : memref<2x16x16xf32, #tpu.memory_space<vmem>>, vector<2x16x16xf32>,
    } else {
    }
    return
  }
  func.func @transform_0(%arg0: i32, %arg1: i32) -> (i32, i32, i32, i32) {
    %c0_i32 = arith.constant 0 : i32
    %c0_i32_0 = arith.constant 0 : i32
    %c0_i32_1 = arith.constant 0 : i32
    return %arg1, %arg0, %c0_i32, %c0_i32_0 : i32, i32, i32, i32
  }
  func.func @transform_1(%arg0: i32, %arg1: i32) -> (i32, i32, i32, i32) {
    %c0_i32 = arith.constant 0 : i32
    %c0_i32_0 = arith.constant 0 : i32
    %c0_i32_1 = arith.constant 0 : i32
    return %arg1, %arg0, %c0_i32, %c0_i32_0 : i32, i32, i32, i32
  }
  func.func @transform_2(%arg0: i32, %arg1: i32) -> (i32, i32, i32, i32) {
    %c0_i32 = arith.constant 0 : i32
    %c0_i32_0 = arith.constant 0 : i32
    %c0_i32_1 = arith.constant 0 : i32
    return %arg1, %arg0, %c0_i32, %c0_i32_0 : i32, i32, i32, i32
  }
  func.func @transform_3(%arg0: i32, %arg1: i32) -> (i32, i32, i32) {
    %c0_i32 = arith.constant 0 : i32
    %c0_i32_0 = arith.constant 0 : i32
    %c0_i32_1 = arith.constant 0 : i32
    return %arg0, %c0_i32, %c0_i32_0 : i32, i32, i32
  }
  func.func @transform_4(%arg0: i32, %arg1: i32) -> (i32, i32, i32) {
    %c0_i32 = arith.constant 0 : i32
    %c0_i32_0 = arith.constant 0 : i32
    %c0_i32_1 = arith.constant 0 : i32
    return %arg0, %c0_i32, %c0_i32_0 : i32, i32, i32
  }
}

</mosaic_0001>

<llo_original>
// kernel: tpu_custom_call.1
$region0: #{tpu_custom_call.1}
  #allocation0 [shape = 'u32[]', space=smem, size = 0x4, offset = 0x4, fixed_abs, tag = 'smem constant byte address 0x4 - core index']
  #allocation1 [shape = 'u32[144,128]{1,0:T(1,128)}', space=vmem, size = 0x12000, scoped, tag = 'internal scratch']
  #allocation2 [shape = 'f32[2,16,16]{2,1,0:T(8,128)}', space=vmem, size = 0x4000, scoped, tag = 'scratch operand']
  #allocation12 [shape = 's32[]', space=sflag, size = 0x4, offset = 0, fixed_abs, tag = 'sflag constant byte address 0x0 - dummy sync flag']
  #allocation14 [shape = 's32[]', space=sflag, size = 0x4, offset = 0, fixed_abs, tag = 'sflag constant byte address 0x0 - dummy sync flag']
  #allocation16 [shape = 's32[]', space=sflag, size = 0x4, offset = 0, fixed_abs, tag = 'sflag constant byte address 0x0 - dummy sync flag']
  %s0 = inlined_call_operand.hbm [shape: f32[8,4,16,16], index: 0, kind: input, shape index: {}]
  %s1 = inlined_call_operand.hbm [shape: f32[8,4,16,16], index: 1, kind: input, shape index: {}]
  %s2 = inlined_call_operand.hbm [shape: f32[8,4,16,16], index: 2, kind: input, shape index: {}]
  %s3 = inlined_call_operand.hbm [shape: f32[4,16,16], index: 3, kind: output, shape index: {0}]
  %s4 = inlined_call_operand.hbm [shape: f32[4,16,16], index: 4, kind: output, shape index: {1}]
  %5 = xla_tuple %s3, %s4
  %s6 = sld [smem:[#allocation0]]
  $region73: #{tpu_custom_call.1} parent=0
    _
  %s8 = ssub.s32 1, %s6
  %s9 = scalar_select 0, %s8, %s6
  $region1: #{tpu_custom_call.1} parent=0
    #allocation3 [shape = 'u8[262144]{0}', space=vmem, size = 0x40000, scoped, tag = 'input window, operand 0']
    #allocation4 [shape = 's32[2]{0}', space=sflag, size = 0x8, scoped, tag = 'scoped memory for tpu_custom_call.1']
    #allocation5 [shape = 's32[2]{0}', space=sflag, size = 0x8, scoped, tag = 'scoped memory for tpu_custom_call.1']
    #allocation6 [shape = 'u8[262144]{0}', space=vmem, size = 0x40000, scoped, tag = 'input window, operand 1']
    #allocation7 [shape = 's32[2]{0}', space=sflag, size = 0x8, scoped, tag = 'scoped memory for tpu_custom_call.1']
    #allocation8 [shape = 'u8[262144]{0}', space=vmem, size = 0x40000, scoped, tag = 'input window, operand 2']
    #allocation9 [shape = 'u8[32768]{0}', space=vmem, size = 0x8000, scoped, tag = 'output window, operand 0']
    #allocation10 [shape = 'u8[32768]{0}', space=vmem, size = 0x8000, scoped, tag = 'output window, operand 1']
    #allocation11 [shape = 's32[2]{0}', space=sflag, size = 0x8, scoped, tag = 'scoped memory for tpu_custom_call.1']
    %10 = vsyncpa [#allocation4], 0
    %s11 = scalar_lea.sflag [#allocation4], 1
    %12 = vsyncpa %s11, 0
    %13 = vsyncpa [#allocation7], 0
    %s14 = scalar_lea.sflag [#allocation7], 1
    %15 = vsyncpa %s14, 0
    %16 = vsyncpa [#allocation5], 0
    %s17 = scalar_lea.sflag [#allocation5], 1
    %18 = vsyncpa %s17, 0
    %19 = vsyncpa [#allocation11], 0
    %s20 = scalar_lea.sflag [#allocation11], 1
    %21 = vsyncpa %s20, 0
    loop: start=0, step=1, limit=4
    $region2: #{tpu_custom_call.1} parent=1 // loop_pre_header
      _
    $region3: #{tpu_custom_call.1} parent=1 // loop_header
      %s23 = sphi 0, %s27
      %p24 = scmp.ge.s32.totalorder %s23, 4
      %s30 = sphi 0, %s42
      %s31 = sphi 0, %s38
      %s32 = sphi 0, %s30
      %s33 = sphi 0, %s31
      %s34 = sphi 0, %s32
      %s35 = sphi 0, %s33
      %s47 = sphi 0, %s49
      %s50 = sphi 0, %s47
      %s51 = sphi 0, %s50
      %s67 = sphi 0, %s51
      %s75 = sphi 0, %s77
      %s78 = sphi 0, %s75
      %s79 = sphi 0, %s78
      %s95 = sphi 0, %s79
      %s103 = sphi 0, %s105
      %s106 = sphi 0, %s103
      %s107 = sphi 0, %s106
      %s123 = sphi 0, %s107
      %s129 = sphi 0, %s131
      %s132 = sphi 0, %s129
      %s133 = sphi 0, %s132
      %s149 = sphi 0, %s133
      %s155 = sphi 0, %s157
      %s158 = sphi 0, %s155
      %s159 = sphi 0, %s158
      %s175 = sphi 0, %s159
    $region4: #{tpu_custom_call.1} parent=1 // loop_header_branch
      %26 = sbr.rel (%p24) target = $region8
    $region5: #{tpu_custom_call.1} parent=1 // loop_body
      %s28 = ssub.s32 %s23, 1
      %s29 = ssub.s32 %s23, 2
      %s36 = sadd.s32 1, %s31
      %p37 = scmp.ge.s32.totalorder %s36, 1
      %s38 = scalar_select %p37, 0, %s36
      %s39 = sadd.s32 1, %s30
      %s40 = scalar_select %p37, %s39, %s30
      %p41 = scmp.ge.s32.totalorder %s40, 2
      %s42 = scalar_select %p41, 0, %s40
      %s43 = ssub.s32 %s31, %s38
      %s44 = ssub.s32 %s30, %s42
      %s45 = sor.u32 %s43, %s44
      %p46 = scmp.eq.s32.totalorder %s45, 0
      %s48 = sadd.s32 %s47, 1
      %s49 = scalar_select %p46, %s47, %s48
      %p52 = pneg %p46
      %p53 = scmp.eq.s32.totalorder %s23, 1
      %p54 = por %p52, %p53
      %p55 = scmp.ne.s32.totalorder %s47, %s50
      %p56 = scmp.eq.s32.totalorder %s23, 0
      %p57 = por %p55, %p56
      %p58 = scmp.ne.s32.totalorder %s47, %s50
      %p59 = scmp.eq.s32.totalorder %s28, 1
      %p60 = por %p58, %p59
      %p61 = scmp.ne.s32.totalorder %s50, %s51
      %p62 = scmp.eq.s32.totalorder %s28, 0
      %p63 = por %p61, %p62
      %p64 = scmp.ne.s32.totalorder %s50, %s51
      %p65 = scmp.eq.s32.totalorder %s29, 1
      %p66 = por %p64, %p65
      %p68 = scmp.ne.s32.totalorder %s51, %s67
      %p69 = scmp.eq.s32.totalorder %s29, 0
      %p70 = por %p68, %p69
      %s71 = ssub.s32 %s31, %s38
      %s72 = ssub.s32 %s30, %s42
      %s73 = sor.u32 %s71, %s72
      %p74 = scmp.eq.s32.totalorder %s73, 0
      %s76 = sadd.s32 %s75, 1
      %s77 = scalar_select %p74, %s75, %s76
      %p80 = pneg %p74
      %p81 = scmp.eq.s32.totalorder %s23, 1
      %p82 = por %p80, %p81
      %p83 = scmp.ne.s32.totalorder %s75, %s78
      %p84 = scmp.eq.s32.totalorder %s23, 0
      %p85 = por %p83, %p84
      %p86 = scmp.ne.s32.totalorder %s75, %s78
      %p87 = scmp.eq.s32.totalorder %s28, 1
      %p88 = por %p86, %p87
      %p89 = scmp.ne.s32.totalorder %s78, %s79
      %p90 = scmp.eq.s32.totalorder %s28, 0
      %p91 = por %p89, %p90
      %p92 = scmp.ne.s32.totalorder %s78, %s79
      %p93 = scmp.eq.s32.totalorder %s29, 1
      %p94 = por %p92, %p93
      %p96 = scmp.ne.s32.totalorder %s79, %s95
      %p97 = scmp.eq.s32.totalorder %s29, 0
      %p98 = por %p96, %p97
      %s99 = ssub.s32 %s31, %s38
      %s100 = ssub.s32 %s30, %s42
      %s101 = sor.u32 %s99, %s100
      %p102 = scmp.eq.s32.totalorder %s101, 0
      %s104 = sadd.s32 %s103, 1
      %s105 = scalar_select %p102, %s103, %s104
      %p108 = pneg %p102
      %p109 = scmp.eq.s32.totalorder %s23, 1
      %p110 = por %p108, %p109
      %p111 = scmp.ne.s32.totalorder %s103, %s106
      %p112 = scmp.eq.s32.totalorder %s23, 0
      %p113 = por %p111, %p112
      %p114 = scmp.ne.s32.totalorder %s103, %s106
      %p115 = scmp.eq.s32.totalorder %s28, 1
      %p116 = por %p114, %p115
      %p117 = scmp.ne.s32.totalorder %s106, %s107
      %p118 = scmp.eq.s32.totalorder %s28, 0
      %p119 = por %p117, %p118
      %p120 = scmp.ne.s32.totalorder %s106, %s107
      %p121 = scmp.eq.s32.totalorder %s29, 1
      %p122 = por %p120, %p121
      %p124 = scmp.ne.s32.totalorder %s107, %s123
      %p125 = scmp.eq.s32.totalorder %s29, 0
      %p126 = por %p124, %p125
      %s127 = ssub.s32 %s30, %s42
      %p128 = scmp.eq.s32.totalorder %s127, 0
      %s130 = sadd.s32 %s129, 1
      %s131 = scalar_select %p128, %s129, %s130
      %p134 = pneg %p128
      %p135 = scmp.eq.s32.totalorder %s23, 1
      %p136 = por %p134, %p135
      %p137 = scmp.ne.s32.totalorder %s129, %s132
      %p138 = scmp.eq.s32.totalorder %s23, 0
      %p139 = por %p137, %p138
      %p140 = scmp.ne.s32.totalorder %s129, %s132
      %p141 = scmp.eq.s32.totalorder %s28, 1
      %p142 = por %p140, %p141
      %p143 = scmp.ne.s32.totalorder %s132, %s133
      %p144 = scmp.eq.s32.totalorder %s28, 0
      %p145 = por %p143, %p144
      %p146 = scmp.ne.s32.totalorder %s132, %s133
      %p147 = scmp.eq.s32.totalorder %s29, 1
      %p148 = por %p146, %p147
      %p150 = scmp.ne.s32.totalorder %s133, %s149
      %p151 = scmp.eq.s32.totalorder %s29, 0
      %p152 = por %p150, %p151
      %s153 = ssub.s32 %s30, %s42
      %p154 = scmp.eq.s32.totalorder %s153, 0
      %s156 = sadd.s32 %s155, 1
      %s157 = scalar_select %p154, %s155, %s156
      %p160 = pneg %p154
      %p161 = scmp.eq.s32.totalorder %s23, 1
      %p162 = por %p160, %p161
      %p163 = scmp.ne.s32.totalorder %s155, %s158
      %p164 = scmp.eq.s32.totalorder %s23, 0
      %p165 = por %p163, %p164
      %p166 = scmp.ne.s32.totalorder %s155, %s158
      %p167 = scmp.eq.s32.totalorder %s28, 1
      %p168 = por %p166, %p167
      %p169 = scmp.ne.s32.totalorder %s158, %s159
      %p170 = scmp.eq.s32.totalorder %s28, 0
      %p171 = por %p169, %p170
      %p172 = scmp.ne.s32.totalorder %s158, %s159
      %p173 = scmp.eq.s32.totalorder %s29, 1
      %p174 = por %p172, %p173
      %p176 = scmp.ne.s32.totalorder %s159, %s175
      %p177 = scmp.eq.s32.totalorder %s29, 0
      %p178 = por %p176, %p177
      %p179 = scmp.le.s32.totalorder 1, %s23
      %p180 = scmp.lt.s32.totalorder %s23, 3
      %p181 = pnand %p179, %p180
      %p182 = pneg %p181
      // Predicated region
      $region9: #{tpu_custom_call.1} parent=5 // pred_check
        _
      $region10: #{tpu_custom_call.1} parent=5 // pred_check_branch
        %184 = sbr.rel (%p181) target = $region12
      $region11: #{tpu_custom_call.1} parent=5 // pred_region
        %s185 = ssub.s32 %s23, 1
      $region12: #{tpu_custom_call.1} parent=5 // pred_fallthru
        _
      %p186 = scmp.lt.s32.totalorder %s23, 2
      // Predicated region
      $region13: #{tpu_custom_call.1} parent=5 // pred_check
        %p187 = pneg %p186
      $region14: #{tpu_custom_call.1} parent=5 // pred_check_branch
        %189 = sbr.rel (%p187) target = $region16
      $region15: #{tpu_custom_call.1} parent=5 // pred_region
        // Predicated region
        $region17: #{tpu_custom_call.1} parent=15 // pred_check
          %p190 = pneg %p57
        $region18: #{tpu_custom_call.1} parent=15 // pred_check_branch
          %192 = sbr.rel (%p190) target = $region20
        $region19: #{tpu_custom_call.1} parent=15 // pred_region
          #allocation13 [shape = 'u32[6]{0}', space=smem, size = 0x18, scoped, tag = 'DMA stride descriptor']
          %s193 = sand.u32 %s47, 1
          %s194 = scalar_lea.sflag [#allocation4], %s193
          %s195 = sand.u32 %s47, 1
          %s196 = smul.addr %s195, 256
          %s197 = scalar_lea.vmem [#allocation3], %s196
          %s198 = smul.u32 8, %s31
          %s199 = smul.u32 2, %s30
          %s201 = ssub.s32 4096, 4096
          %202 = vsyncadd %s194, %s201
          %s203 = smul.addr %s199, 2
          %s204 = smul.addr %s198, 8
          %s205 = sadd.s32 %s203, %s204
          %s206 = smul.addr %s205, 128
          %s207 = scalar_lea.hbm %s0, %s206
          %s209 = sshll.u32 1, 14
          %s210 = sxor.u32 4294967295, %s209
          %s212 = sld [smem:[#allocation0]]
          %s213 = sadd.s32 2, %s212
          %s215 = sshll.u32 7, 26
          %s216 = sxor.u32 4294967295, %s215
          %s217 = sand.u32 0, %s216
          %s218 = sshll.u32 %s213, 26
          %s219 = sor.u32 %s217, %s218
          %s220 = sshll.u32 %s197, 4
          %s221 = int_to_ptr.vmem [resolvable:$true] %s220
          %227 = sst [smem:[#allocation13]] 1024
          %s228 = scalar_lea.smem [#allocation13], 1
          %229 = sst [smem:[%s228]] 512
          %s230 = scalar_lea.smem [#allocation13], 2
          %231 = sst [smem:[%s230]] 4
          %s232 = scalar_lea.smem [#allocation13], 3
          %233 = sst [smem:[%s232]] 128
          %s234 = scalar_lea.smem [#allocation13], 4
          %235 = sst [smem:[%s234]] 128
          %s236 = scalar_lea.smem [#allocation13], 5
          %237 = sst [smem:[%s236]] 8
          %239 = dma.general %s207, 4096, %s221, %s194, [#allocation12], [#allocation13], %s219, 0
        $region20: #{tpu_custom_call.1} parent=15 // pred_fallthru
          _
        // Predicated region
        $region21: #{tpu_custom_call.1} parent=15 // pred_check
          %p240 = pneg %p85
        $region22: #{tpu_custom_call.1} parent=15 // pred_check_branch
          %242 = sbr.rel (%p240) target = $region24
        $region23: #{tpu_custom_call.1} parent=15 // pred_region
          #allocation15 [shape = 'u32[6]{0}', space=smem, size = 0x18, scoped, tag = 'DMA stride descriptor']
          %s243 = sand.u32 %s23, 1
          %s244 = scalar_lea.sflag [#allocation7], %s243
          %s245 = sand.u32 %s75, 1
          %s246 = smul.addr %s245, 256
          %s247 = scalar_lea.vmem [#allocation6], %s246
          %s248 = smul.u32 8, %s31
          %s249 = smul.u32 2, %s30
          %s251 = ssub.s32 4096, 4096
          %252 = vsyncadd %s244, %s251
          %s253 = smul.addr %s249, 2
          %s254 = smul.addr %s248, 8
          %s255 = sadd.s32 %s253, %s254
          %s256 = smul.addr %s255, 128
          %s257 = scalar_lea.hbm %s1, %s256
          %s259 = sshll.u32 1, 14
          %s260 = sxor.u32 4294967295, %s259
          %s262 = sld [smem:[#allocation0]]
          %s263 = sadd.s32 2, %s262
          %s265 = sshll.u32 7, 26
          %s266 = sxor.u32 4294967295, %s265
          %s267 = sand.u32 0, %s266
          %s268 = sshll.u32 %s263, 26
          %s269 = sor.u32 %s267, %s268
          %s270 = sshll.u32 %s247, 4
          %s271 = int_to_ptr.vmem [resolvable:$true] %s270
          %277 = sst [smem:[#allocation15]] 1024
          %s278 = scalar_lea.smem [#allocation15], 1
          %279 = sst [smem:[%s278]] 512
          %s280 = scalar_lea.smem [#allocation15], 2
          %281 = sst [smem:[%s280]] 4
          %s282 = scalar_lea.smem [#allocation15], 3
          %283 = sst [smem:[%s282]] 128
          %s284 = scalar_lea.smem [#allocation15], 4
          %285 = sst [smem:[%s284]] 128
          %s286 = scalar_lea.smem [#allocation15], 5
          %287 = sst [smem:[%s286]] 8
          %289 = dma.general %s257, 4096, %s271, %s244, [#allocation14], [#allocation15], %s269, 0
        $region24: #{tpu_custom_call.1} parent=15 // pred_fallthru
          _
        // Predicated region
        $region25: #{tpu_custom_call.1} parent=15 // pred_check
          %p290 = pneg %p113
        $region26: #{tpu_custom_call.1} parent=15 // pred_check_branch
          %292 = sbr.rel (%p290) target = $region28
        $region27: #{tpu_custom_call.1} parent=15 // pred_region
          #allocation17 [shape = 'u32[6]{0}', space=smem, size = 0x18, scoped, tag = 'DMA stride descriptor']
          %s293 = sand.u32 %s23, 1
          %s294 = scalar_lea.sflag [#allocation7], %s293
          %s295 = sand.u32 %s103, 1
          %s296 = smul.addr %s295, 256
          %s297 = scalar_lea.vmem [#allocation8], %s296
          %s298 = smul.u32 8, %s31
          %s299 = smul.u32 2, %s30
          %s301 = ssub.s32 4096, 4096
          %302 = vsyncadd %s294, %s301
          %s303 = smul.addr %s299, 2
          %s304 = smul.addr %s298, 8
          %s305 = sadd.s32 %s303, %s304
          %s306 = smul.addr %s305, 128
          %s307 = scalar_lea.hbm %s2, %s306
          %s309 = sshll.u32 1, 14
          %s310 = sxor.u32 4294967295, %s309
          %s312 = sld [smem:[#allocation0]]
          %s313 = sadd.s32 2, %s312
          %s315 = sshll.u32 7, 26
          %s316 = sxor.u32 4294967295, %s315
          %s317 = sand.u32 0, %s316
          %s318 = sshll.u32 %s313, 26
          %s319 = sor.u32 %s317, %s318
          %s320 = sshll.u32 %s297, 4
          %s321 = int_to_ptr.vmem [resolvable:$true] %s320
          %327 = sst [smem:[#allocation17]] 1024
          %s328 = scalar_lea.smem [#allocation17], 1
          %329 = sst [smem:[%s328]] 512
          %s330 = scalar_lea.smem [#allocation17], 2
          %331 = sst [smem:[%s330]] 4
          %s332 = scalar_lea.smem [#allocation17], 3
          %333 = sst [smem:[%s332]] 128
          %s334 = scalar_lea.smem [#allocation17], 4
          %335 = sst [smem:[%s334]] 128
          %s336 = scalar_lea.smem [#allocation17], 5
          %337 = sst [smem:[%s336]] 8
          %339 = dma.general %s307, 4096, %s321, %s294, [#allocation16], [#allocation17], %s319, 0
        $region28: #{tpu_custom_call.1} parent=15 // pred_fallthru
          _
      $region16: #{tpu_custom_call.1} parent=5 // pred_fallthru
        _
      %p340 = scmp.le.s32.totalorder 1, %s23
      %p341 = scmp.lt.s32.totalorder %s23, 3
      %p342 = pnand %p340, %p341
      %p343 = pneg %p342
      // Predicated region
      $region29: #{tpu_custom_call.1} parent=5 // pred_check
        _
      $region30: #{tpu_custom_call.1} parent=5 // pred_check_branch
        %345 = sbr.rel (%p342) target = $region32
      $region31: #{tpu_custom_call.1} parent=5 // pred_region
        %s346 = ssub.s32 %s23, 1
        %s347 = sand.u32 %s50, 1
        %s348 = scalar_lea.sflag [#allocation4], %s347
        %s349 = sand.u32 %s50, 1
        %s350 = smul.addr %s349, 256
        %s351 = scalar_lea.vmem [#allocation3], %s350
        // Predicated region
        $region33: #{tpu_custom_call.1} parent=31 // pred_check
          %p352 = pneg %p63
        $region34: #{tpu_custom_call.1} parent=31 // pred_check_branch
          %354 = sbr.rel (%p352) target = $region36
        $region35: #{tpu_custom_call.1} parent=31 // pred_region
          %355 = dma.done %s348, 4096
        $region36: #{tpu_custom_call.1} parent=31 // pred_fallthru
          _
        %s356 = sand.u32 %s28, 1
        %s357 = scalar_lea.sflag [#allocation7], %s356
        %s358 = sand.u32 %s78, 1
        %s359 = smul.addr %s358, 256
        %s360 = scalar_lea.vmem [#allocation6], %s359
        // Predicated region
        $region37: #{tpu_custom_call.1} parent=31 // pred_check
          %p361 = pneg %p91
        $region38: #{tpu_custom_call.1} parent=31 // pred_check_branch
          %363 = sbr.rel (%p361) target = $region40
        $region39: #{tpu_custom_call.1} parent=31 // pred_region
          %364 = dma.done %s357, 4096
        $region40: #{tpu_custom_call.1} parent=31 // pred_fallthru
          _
        %s365 = sand.u32 %s28, 1
        %s366 = scalar_lea.sflag [#allocation7], %s365
        %s367 = sand.u32 %s106, 1
        %s368 = smul.addr %s367, 256
        %s369 = scalar_lea.vmem [#allocation8], %s368
        // Predicated region
        $region41: #{tpu_custom_call.1} parent=31 // pred_check
          %p370 = pneg %p119
        $region42: #{tpu_custom_call.1} parent=31 // pred_check_branch
          %372 = sbr.rel (%p370) target = $region44
        $region43: #{tpu_custom_call.1} parent=31 // pred_region
          %373 = dma.done %s366, 4096
        $region44: #{tpu_custom_call.1} parent=31 // pred_fallthru
          _
        %s374 = sand.u32 %s50, 1
        %s375 = scalar_lea.sflag [#allocation4], %s374
        %s376 = sand.u32 %s50, 1
        %s377 = smul.addr %s376, 256
        %s378 = scalar_lea.vmem [#allocation3], %s377
        %p379 = pneg %p63
        %p380 = pneg %p60
        %s381 = sand.u32 %s28, 1
        %s382 = scalar_lea.sflag [#allocation7], %s381
        %s383 = sand.u32 %s78, 1
        %s384 = smul.addr %s383, 256
        %s385 = scalar_lea.vmem [#allocation6], %s384
        %p386 = pneg %p91
        %p387 = pneg %p88
        %s388 = sand.u32 %s28, 1
        %s389 = scalar_lea.sflag [#allocation7], %s388
        %s390 = sand.u32 %s106, 1
        %s391 = smul.addr %s390, 256
        %s392 = scalar_lea.vmem [#allocation8], %s391
        %p393 = pneg %p119
        %p394 = pneg %p116
        %p395 = pneg %p145
        %p396 = pneg %p142
        %s397 = sand.u32 %s132, 1
        %s398 = scalar_lea.sflag [#allocation5], %s397
        %s399 = sand.u32 %s132, 1
        %s400 = smul.addr %s399, 32
        %s401 = scalar_lea.vmem [#allocation9], %s400
        %p402 = pneg %p171
        %p403 = pneg %p168
        %s404 = sand.u32 %s158, 1
        %s405 = scalar_lea.sflag [#allocation11], %s404
        %s406 = sand.u32 %s158, 1
        %s407 = smul.addr %s406, 32
        %s408 = scalar_lea.vmem [#allocation10], %s407
        %s409 = smul.u32 8, %s33
        %s410 = smul.u32 2, %s32
        %s411 = smul.u32 8, %s33
        %s412 = smul.u32 2, %s32
        %s413 = smul.u32 8, %s33
        %s414 = smul.u32 2, %s32
        %s415 = smul.u32 2, %s32
        %s416 = smul.u32 2, %s32
        %p417 = scmp.eq.s32.totalorder %s33, 0
        // Predicated region
        $region45: #{tpu_custom_call.1} parent=31 // pred_check
          %p418 = pneg %p417
        $region46: #{tpu_custom_call.1} parent=31 // pred_check_branch
          %420 = sbr.rel (%p418) target = $region48
        $region47: #{tpu_custom_call.1} parent=31 // pred_region
          %vm421 = vcmask 130048
          %422 = vst.msk [vmem:[%s401] sm:$0xff] %vm421, 0.0
          %423 = vst.msk [vmem:[%s401 + $0x8] sm:$0xff] %vm421, 0.0
          %424 = vst.msk [vmem:[%s401 + $0x10] sm:$0xff] %vm421, 0.0
          %425 = vst.msk [vmem:[%s401 + $0x18] sm:$0xff] %vm421, 0.0
          %426 = vst.msk [vmem:[%s408] sm:$0xff] %vm421, 0.0
          %427 = vst.msk [vmem:[%s408 + $0x8] sm:$0xff] %vm421, 0.0
          %428 = vst.msk [vmem:[%s408 + $0x10] sm:$0xff] %vm421, 0.0
          %429 = vst.msk [vmem:[%s408 + $0x18] sm:$0xff] %vm421, 0.0
          %430 = vst.msk [vmem:[#allocation2] sm:$0xff] %vm421, 0.0
          %431 = vst.msk [vmem:[#allocation2 + $0x8] sm:$0xff] %vm421, 0.0
          %432 = vst.msk [vmem:[#allocation2 + $0x10] sm:$0xff] %vm421, 0.0
          %433 = vst.msk [vmem:[#allocation2 + $0x18] sm:$0xff] %vm421, 0.0
        $region48: #{tpu_custom_call.1} parent=31 // pred_fallthru
          _
        %v434 = vld [vmem:[%s401] sm:$0xff]
        %v435 = vld [vmem:[%s401 + $0x8] sm:$0xff]
        %v436 = vld [vmem:[%s401 + $0x10] sm:$0xff]
        %v437 = vld [vmem:[%s401 + $0x18] sm:$0xff]
        %v438 = vld [vmem:[%s351] sm:$0xff]
        %v439 = vld [vmem:[%s351 + $0x8] sm:$0xff]
        %v440 = vld [vmem:[%s351 + $0x10] sm:$0xff]
        %v441 = vld [vmem:[%s351 + $0x18] sm:$0xff]
        %v442 = vld [vmem:[%s351 + $0x20] sm:$0xff]
        %v443 = vld [vmem:[%s351 + $0x28] sm:$0xff]
        %v444 = vld [vmem:[%s351 + $0x30] sm:$0xff]
        %v445 = vld [vmem:[%s351 + $0x38] sm:$0xff]
        %v446 = vld [vmem:[%s351 + $0x40] sm:$0xff]
        %v447 = vld [vmem:[%s351 + $0x48] sm:$0xff]
        %v448 = vld [vmem:[%s351 + $0x50] sm:$0xff]
        %v449 = vld [vmem:[%s351 + $0x58] sm:$0xff]
        %v450 = vld [vmem:[%s351 + $0x60] sm:$0xff]
        %v451 = vld [vmem:[%s351 + $0x68] sm:$0xff]
        %v452 = vld [vmem:[%s351 + $0x70] sm:$0xff]
        %v453 = vld [vmem:[%s351 + $0x78] sm:$0xff]
        %v454 = vld [vmem:[%s351 + $0x80] sm:$0xff]
        %v455 = vld [vmem:[%s351 + $0x88] sm:$0xff]
        %v456 = vld [vmem:[%s351 + $0x90] sm:$0xff]
        %v457 = vld [vmem:[%s351 + $0x98] sm:$0xff]
        %v458 = vld [vmem:[%s351 + $0xa0] sm:$0xff]
        %v459 = vld [vmem:[%s351 + $0xa8] sm:$0xff]
        %v460 = vld [vmem:[%s351 + $0xb0] sm:$0xff]
        %v461 = vld [vmem:[%s351 + $0xb8] sm:$0xff]
        %v462 = vld [vmem:[%s351 + $0xc0] sm:$0xff]
        %v463 = vld [vmem:[%s351 + $0xc8] sm:$0xff]
        %v464 = vld [vmem:[%s351 + $0xd0] sm:$0xff]
        %v465 = vld [vmem:[%s351 + $0xd8] sm:$0xff]
        %v466 = vld [vmem:[%s351 + $0xe0] sm:$0xff]
        %v467 = vld [vmem:[%s351 + $0xe8] sm:$0xff]
        %v468 = vld [vmem:[%s351 + $0xf0] sm:$0xff]
        %v469 = vld [vmem:[%s351 + $0xf8] sm:$0xff]
        %vm470 = vcmask 130048
        %v471 = vsel %vm470, %v438, 0.0
        %v472 = vsel %vm470, %v442, 0.0
        %v473 = vadd.f32 %v471, %v472
        %v474 = vsel %vm470, %v446, 0.0
        %v475 = vadd.f32 %v473, %v474
        %v476 = vsel %vm470, %v450, 0.0
        %v477 = vadd.f32 %v475, %v476
        %v478 = vsel %vm470, %v454, 0.0
        %v479 = vadd.f32 %v477, %v478
        %v480 = vsel %vm470, %v458, 0.0
        %v481 = vadd.f32 %v479, %v480
        %v482 = vsel %vm470, %v462, 0.0
        %v483 = vadd.f32 %v481, %v482
        %v484 = vsel %vm470, %v466, 0.0
        %v485 = vadd.f32 %v483, %v484
        %v486 = vsel %vm470, %v439, 0.0
        %v487 = vsel %vm470, %v443, 0.0
        %v488 = vadd.f32 %v486, %v487
        %v489 = vsel %vm470, %v447, 0.0
        %v490 = vadd.f32 %v488, %v489
        %v491 = vsel %vm470, %v451, 0.0
        %v492 = vadd.f32 %v490, %v491
        %v493 = vsel %vm470, %v455, 0.0
        %v494 = vadd.f32 %v492, %v493
        %v495 = vsel %vm470, %v459, 0.0
        %v496 = vadd.f32 %v494, %v495
        %v497 = vsel %vm470, %v463, 0.0
        %v498 = vadd.f32 %v496, %v497
        %v499 = vsel %vm470, %v467, 0.0
        %v500 = vadd.f32 %v498, %v499
        %v501 = vsel %vm470, %v440, 0.0
        %v502 = vsel %vm470, %v444, 0.0
        %v503 = vadd.f32 %v501, %v502
        %v504 = vsel %vm470, %v448, 0.0
        %v505 = vadd.f32 %v503, %v504
        %v506 = vsel %vm470, %v452, 0.0
        %v507 = vadd.f32 %v505, %v506
        %v508 = vsel %vm470, %v456, 0.0
        %v509 = vadd.f32 %v507, %v508
        %v510 = vsel %vm470, %v460, 0.0
        %v511 = vadd.f32 %v509, %v510
        %v512 = vsel %vm470, %v464, 0.0
        %v513 = vadd.f32 %v511, %v512
        %v514 = vsel %vm470, %v468, 0.0
        %v515 = vadd.f32 %v513, %v514
        %v516 = vsel %vm470, %v441, 0.0
        %v517 = vsel %vm470, %v445, 0.0
        %v518 = vadd.f32 %v516, %v517
        %v519 = vsel %vm470, %v449, 0.0
        %v520 = vadd.f32 %v518, %v519
        %v521 = vsel %vm470, %v453, 0.0
        %v522 = vadd.f32 %v520, %v521
        %v523 = vsel %vm470, %v457, 0.0
        %v524 = vadd.f32 %v522, %v523
        %v525 = vsel %vm470, %v461, 0.0
        %v526 = vadd.f32 %v524, %v525
        %v527 = vsel %vm470, %v465, 0.0
        %v528 = vadd.f32 %v526, %v527
        %v529 = vsel %vm470, %v469, 0.0
        %v530 = vadd.f32 %v528, %v529
        %v531 = vadd.f32 %v434, %v485
        %v532 = vadd.f32 %v435, %v500
        %v533 = vadd.f32 %v436, %v515
        %v534 = vadd.f32 %v437, %v530
        %535 = vst.msk [vmem:[%s401] sm:$0xff] %vm470, %v531
        %536 = vst.msk [vmem:[%s401 + $0x8] sm:$0xff] %vm470, %v532
        %537 = vst.msk [vmem:[%s401 + $0x10] sm:$0xff] %vm470, %v533
        %538 = vst.msk [vmem:[%s401 + $0x18] sm:$0xff] %vm470, %v534
        %v539 = vld [vmem:[%s408] sm:$0xff]
        %v540 = vld [vmem:[%s408 + $0x8] sm:$0xff]
        %v541 = vld [vmem:[%s408 + $0x10] sm:$0xff]
        %v542 = vld [vmem:[%s408 + $0x18] sm:$0xff]
        %v543 = vld [vmem:[%s360] sm:$0xff]
        %v544 = vld [vmem:[%s360 + $0x8] sm:$0xff]
        %v545 = vld [vmem:[%s360 + $0x10] sm:$0xff]
        %v546 = vld [vmem:[%s360 + $0x18] sm:$0xff]
        %v547 = vld [vmem:[%s360 + $0x20] sm:$0xff]
        %v548 = vld [vmem:[%s360 + $0x28] sm:$0xff]
        %v549 = vld [vmem:[%s360 + $0x30] sm:$0xff]
        %v550 = vld [vmem:[%s360 + $0x38] sm:$0xff]
        %v551 = vld [vmem:[%s360 + $0x40] sm:$0xff]
        %v552 = vld [vmem:[%s360 + $0x48] sm:$0xff]
        %v553 = vld [vmem:[%s360 + $0x50] sm:$0xff]
        %v554 = vld [vmem:[%s360 + $0x58] sm:$0xff]
        %v555 = vld [vmem:[%s360 + $0x60] sm:$0xff]
        %v556 = vld [vmem:[%s360 + $0x68] sm:$0xff]
        %v557 = vld [vmem:[%s360 + $0x70] sm:$0xff]
        %v558 = vld [vmem:[%s360 + $0x78] sm:$0xff]
        %v559 = vld [vmem:[%s360 + $0x80] sm:$0xff]
        %v560 = vld [vmem:[%s360 + $0x88] sm:$0xff]
        %v561 = vld [vmem:[%s360 + $0x90] sm:$0xff]
        %v562 = vld [vmem:[%s360 + $0x98] sm:$0xff]
        %v563 = vld [vmem:[%s360 + $0xa0] sm:$0xff]
        %v564 = vld [vmem:[%s360 + $0xa8] sm:$0xff]
        %v565 = vld [vmem:[%s360 + $0xb0] sm:$0xff]
        %v566 = vld [vmem:[%s360 + $0xb8] sm:$0xff]
        %v567 = vld [vmem:[%s360 + $0xc0] sm:$0xff]
        %v568 = vld [vmem:[%s360 + $0xc8] sm:$0xff]
        %v569 = vld [vmem:[%s360 + $0xd0] sm:$0xff]
        %v570 = vld [vmem:[%s360 + $0xd8] sm:$0xff]
        %v571 = vld [vmem:[%s360 + $0xe0] sm:$0xff]
        %v572 = vld [vmem:[%s360 + $0xe8] sm:$0xff]
        %v573 = vld [vmem:[%s360 + $0xf0] sm:$0xff]
        %v574 = vld [vmem:[%s360 + $0xf8] sm:$0xff]
        %v575 = vsel %vm470, %v543, 0.0
        %v576 = vsel %vm470, %v547, 0.0
        %v577 = vadd.f32 %v575, %v576
        %v578 = vsel %vm470, %v551, 0.0
        %v579 = vadd.f32 %v577, %v578
        %v580 = vsel %vm470, %v555, 0.0
        %v581 = vadd.f32 %v579, %v580
        %v582 = vsel %vm470, %v559, 0.0
        %v583 = vadd.f32 %v581, %v582
        %v584 = vsel %vm470, %v563, 0.0
        %v585 = vadd.f32 %v583, %v584
        %v586 = vsel %vm470, %v567, 0.0
        %v587 = vadd.f32 %v585, %v586
        %v588 = vsel %vm470, %v571, 0.0
        %v589 = vadd.f32 %v587, %v588
        %v590 = vsel %vm470, %v544, 0.0
        %v591 = vsel %vm470, %v548, 0.0
        %v592 = vadd.f32 %v590, %v591
        %v593 = vsel %vm470, %v552, 0.0
        %v594 = vadd.f32 %v592, %v593
        %v595 = vsel %vm470, %v556, 0.0
        %v596 = vadd.f32 %v594, %v595
        %v597 = vsel %vm470, %v560, 0.0
        %v598 = vadd.f32 %v596, %v597
        %v599 = vsel %vm470, %v564, 0.0
        %v600 = vadd.f32 %v598, %v599
        %v601 = vsel %vm470, %v568, 0.0
        %v602 = vadd.f32 %v600, %v601
        %v603 = vsel %vm470, %v572, 0.0
        %v604 = vadd.f32 %v602, %v603
        %v605 = vsel %vm470, %v545, 0.0
        %v606 = vsel %vm470, %v549, 0.0
        %v607 = vadd.f32 %v605, %v606
        %v608 = vsel %vm470, %v553, 0.0
        %v609 = vadd.f32 %v607, %v608
        %v610 = vsel %vm470, %v557, 0.0
        %v611 = vadd.f32 %v609, %v610
        %v612 = vsel %vm470, %v561, 0.0
        %v613 = vadd.f32 %v611, %v612
        %v614 = vsel %vm470, %v565, 0.0
        %v615 = vadd.f32 %v613, %v614
        %v616 = vsel %vm470, %v569, 0.0
        %v617 = vadd.f32 %v615, %v616
        %v618 = vsel %vm470, %v573, 0.0
        %v619 = vadd.f32 %v617, %v618
        %v620 = vsel %vm470, %v546, 0.0
        %v621 = vsel %vm470, %v550, 0.0
        %v622 = vadd.f32 %v620, %v621
        %v623 = vsel %vm470, %v554, 0.0
        %v624 = vadd.f32 %v622, %v623
        %v625 = vsel %vm470, %v558, 0.0
        %v626 = vadd.f32 %v624, %v625
        %v627 = vsel %vm470, %v562, 0.0
        %v628 = vadd.f32 %v626, %v627
        %v629 = vsel %vm470, %v566, 0.0
        %v630 = vadd.f32 %v628, %v629
        %v631 = vsel %vm470, %v570, 0.0
        %v632 = vadd.f32 %v630, %v631
        %v633 = vsel %vm470, %v574, 0.0
        %v634 = vadd.f32 %v632, %v633
        %v635 = vadd.f32 %v539, %v589
        %v636 = vadd.f32 %v540, %v604
        %v637 = vadd.f32 %v541, %v619
        %v638 = vadd.f32 %v542, %v634
        %639 = vst.msk [vmem:[%s408] sm:$0xff] %vm470, %v635
        %640 = vst.msk [vmem:[%s408 + $0x8] sm:$0xff] %vm470, %v636
        %641 = vst.msk [vmem:[%s408 + $0x10] sm:$0xff] %vm470, %v637
        %642 = vst.msk [vmem:[%s408 + $0x18] sm:$0xff] %vm470, %v638
        %v643 = vld [vmem:[#allocation2] sm:$0xff]
        %v644 = vld [vmem:[#allocation2 + $0x8] sm:$0xff]
        %v645 = vld [vmem:[#allocation2 + $0x10] sm:$0xff]
        %v646 = vld [vmem:[#allocation2 + $0x18] sm:$0xff]
        %v647 = vld [vmem:[%s369] sm:$0xff]
        %v648 = vld [vmem:[%s369 + $0x8] sm:$0xff]
        %v649 = vld [vmem:[%s369 + $0x10] sm:$0xff]
        %v650 = vld [vmem:[%s369 + $0x18] sm:$0xff]
        %v651 = vld [vmem:[%s369 + $0x20] sm:$0xff]
        %v652 = vld [vmem:[%s369 + $0x28] sm:$0xff]
        %v653 = vld [vmem:[%s369 + $0x30] sm:$0xff]
        %v654 = vld [vmem:[%s369 + $0x38] sm:$0xff]
        %v655 = vld [vmem:[%s369 + $0x40] sm:$0xff]
        %v656 = vld [vmem:[%s369 + $0x48] sm:$0xff]
        %v657 = vld [vmem:[%s369 + $0x50] sm:$0xff]
        %v658 = vld [vmem:[%s369 + $0x58] sm:$0xff]
        %v659 = vld [vmem:[%s369 + $0x60] sm:$0xff]
        %v660 = vld [vmem:[%s369 + $0x68] sm:$0xff]
        %v661 = vld [vmem:[%s369 + $0x70] sm:$0xff]
        %v662 = vld [vmem:[%s369 + $0x78] sm:$0xff]
        %v663 = vld [vmem:[%s369 + $0x80] sm:$0xff]
        %v664 = vld [vmem:[%s369 + $0x88] sm:$0xff]
        %v665 = vld [vmem:[%s369 + $0x90] sm:$0xff]
        %v666 = vld [vmem:[%s369 + $0x98] sm:$0xff]
        %v667 = vld [vmem:[%s369 + $0xa0] sm:$0xff]
        %v668 = vld [vmem:[%s369 + $0xa8] sm:$0xff]
        %v669 = vld [vmem:[%s369 + $0xb0] sm:$0xff]
        %v670 = vld [vmem:[%s369 + $0xb8] sm:$0xff]
        %v671 = vld [vmem:[%s369 + $0xc0] sm:$0xff]
        %v672 = vld [vmem:[%s369 + $0xc8] sm:$0xff]
        %v673 = vld [vmem:[%s369 + $0xd0] sm:$0xff]
        %v674 = vld [vmem:[%s369 + $0xd8] sm:$0xff]
        %v675 = vld [vmem:[%s369 + $0xe0] sm:$0xff]
        %v676 = vld [vmem:[%s369 + $0xe8] sm:$0xff]
        %v677 = vld [vmem:[%s369 + $0xf0] sm:$0xff]
        %v678 = vld [vmem:[%s369 + $0xf8] sm:$0xff]
        %v679 = vsel %vm470, %v647, 0.0
        %v680 = vsel %vm470, %v651, 0.0
        %v681 = vadd.f32 %v679, %v680
        %v682 = vsel %vm470, %v655, 0.0
        %v683 = vadd.f32 %v681, %v682
        %v684 = vsel %vm470, %v659, 0.0
        %v685 = vadd.f32 %v683, %v684
        %v686 = vsel %vm470, %v663, 0.0
        %v687 = vadd.f32 %v685, %v686
        %v688 = vsel %vm470, %v667, 0.0
        %v689 = vadd.f32 %v687, %v688
        %v690 = vsel %vm470, %v671, 0.0
        %v691 = vadd.f32 %v689, %v690
        %v692 = vsel %vm470, %v675, 0.0
        %v693 = vadd.f32 %v691, %v692
        %v694 = vsel %vm470, %v648, 0.0
        %v695 = vsel %vm470, %v652, 0.0
        %v696 = vadd.f32 %v694, %v695
        %v697 = vsel %vm470, %v656, 0.0
        %v698 = vadd.f32 %v696, %v697
        %v699 = vsel %vm470, %v660, 0.0
        %v700 = vadd.f32 %v698, %v699
        %v701 = vsel %vm470, %v664, 0.0
        %v702 = vadd.f32 %v700, %v701
        %v703 = vsel %vm470, %v668, 0.0
        %v704 = vadd.f32 %v702, %v703
        %v705 = vsel %vm470, %v672, 0.0
        %v706 = vadd.f32 %v704, %v705
        %v707 = vsel %vm470, %v676, 0.0
        %v708 = vadd.f32 %v706, %v707
        %v709 = vsel %vm470, %v649, 0.0
        %v710 = vsel %vm470, %v653, 0.0
        %v711 = vadd.f32 %v709, %v710
        %v712 = vsel %vm470, %v657, 0.0
        %v713 = vadd.f32 %v711, %v712
        %v714 = vsel %vm470, %v661, 0.0
        %v715 = vadd.f32 %v713, %v714
        %v716 = vsel %vm470, %v665, 0.0
        %v717 = vadd.f32 %v715, %v716
        %v718 = vsel %vm470, %v669, 0.0
        %v719 = vadd.f32 %v717, %v718
        %v720 = vsel %vm470, %v673, 0.0
        %v721 = vadd.f32 %v719, %v720
        %v722 = vsel %vm470, %v677, 0.0
        %v723 = vadd.f32 %v721, %v722
        %v724 = vsel %vm470, %v650, 0.0
        %v725 = vsel %vm470, %v654, 0.0
        %v726 = vadd.f32 %v724, %v725
        %v727 = vsel %vm470, %v658, 0.0
        %v728 = vadd.f32 %v726, %v727
        %v729 = vsel %vm470, %v662, 0.0
        %v730 = vadd.f32 %v728, %v729
        %v731 = vsel %vm470, %v666, 0.0
        %v732 = vadd.f32 %v730, %v731
        %v733 = vsel %vm470, %v670, 0.0
        %v734 = vadd.f32 %v732, %v733
        %v735 = vsel %vm470, %v674, 0.0
        %v736 = vadd.f32 %v734, %v735
        %v737 = vsel %vm470, %v678, 0.0
        %v738 = vadd.f32 %v736, %v737
        %v739 = vadd.f32 %v643, %v693
        %v740 = vadd.f32 %v644, %v708
        %v741 = vadd.f32 %v645, %v723
        %v742 = vadd.f32 %v646, %v738
        %743 = vst.msk [vmem:[#allocation2] sm:$0xff] %vm470, %v739
        %744 = vst.msk [vmem:[#allocation2 + $0x8] sm:$0xff] %vm470, %v740
        %745 = vst.msk [vmem:[#allocation2 + $0x10] sm:$0xff] %vm470, %v741
        %746 = vst.msk [vmem:[#allocation2 + $0x18] sm:$0xff] %vm470, %v742
        // Predicated region
        $region49: #{tpu_custom_call.1} parent=31 // pred_check
          %p747 = pneg %p417
        $region50: #{tpu_custom_call.1} parent=31 // pred_check_branch
          %749 = sbr.rel (%p747) target = $region52
        $region51: #{tpu_custom_call.1} parent=31 // pred_region
          %v750 = vld [vmem:[#allocation2] sm:$0xff]
          %v751 = vld [vmem:[#allocation2 + $0x8] sm:$0xff]
          %v752 = vld [vmem:[#allocation2 + $0x10] sm:$0xff]
          %v753 = vld [vmem:[#allocation2 + $0x18] sm:$0xff]
          %v754 = vmax.f32 %v750, 1.0
          %v755 = vmax.f32 %v751, 1.0
          %v756 = vmax.f32 %v752, 1.0
          %v757 = vmax.f32 %v753, 1.0
          %v758 = vrcp.pop %v754
          %v759 = vmul.f32 1.0, %v758
          %v760 = vrcp.pop %v755
          %v761 = vmul.f32 1.0, %v760
          %v762 = vrcp.pop %v756
          %v763 = vmul.f32 1.0, %v762
          %v764 = vrcp.pop %v757
          %v765 = vmul.f32 1.0, %v764
          %v766 = vld [vmem:[%s401] sm:$0xff]
          %v767 = vld [vmem:[%s401 + $0x8] sm:$0xff]
          %v768 = vld [vmem:[%s401 + $0x10] sm:$0xff]
          %v769 = vld [vmem:[%s401 + $0x18] sm:$0xff]
          %v770 = vmul.f32 %v766, %v759
          %v771 = vmul.f32 %v767, %v761
          %v772 = vmul.f32 %v768, %v763
          %v773 = vmul.f32 %v769, %v765
          %774 = vst.msk [vmem:[%s401] sm:$0xff] %vm470, %v770
          %775 = vst.msk [vmem:[%s401 + $0x8] sm:$0xff] %vm470, %v771
          %776 = vst.msk [vmem:[%s401 + $0x10] sm:$0xff] %vm470, %v772
          %777 = vst.msk [vmem:[%s401 + $0x18] sm:$0xff] %vm470, %v773
          %v778 = vld [vmem:[%s408] sm:$0xff]
          %v779 = vld [vmem:[%s408 + $0x8] sm:$0xff]
          %v780 = vld [vmem:[%s408 + $0x10] sm:$0xff]
          %v781 = vld [vmem:[%s408 + $0x18] sm:$0xff]
          %v782 = vmul.f32 %v778, %v759
          %v783 = vmul.f32 %v779, %v761
          %v784 = vmul.f32 %v780, %v763
          %v785 = vmul.f32 %v781, %v765
          %786 = vst.msk [vmem:[%s408] sm:$0xff] %vm470, %v782
          %787 = vst.msk [vmem:[%s408 + $0x8] sm:$0xff] %vm470, %v783
          %788 = vst.msk [vmem:[%s408 + $0x10] sm:$0xff] %vm470, %v784
          %789 = vst.msk [vmem:[%s408 + $0x18] sm:$0xff] %vm470, %v785
        $region52: #{tpu_custom_call.1} parent=31 // pred_fallthru
          _
        %s790 = sand.u32 %s132, 1
        %s791 = scalar_lea.sflag [#allocation5], %s790
        %s792 = sand.u32 %s132, 1
        %s793 = smul.addr %s792, 32
        %s794 = scalar_lea.vmem [#allocation9], %s793
        %s795 = sand.u32 %s158, 1
        %s796 = scalar_lea.sflag [#allocation11], %s795
        %s797 = sand.u32 %s158, 1
        %s798 = smul.addr %s797, 32
        %s799 = scalar_lea.vmem [#allocation10], %s798
        // Predicated region
        $region53: #{tpu_custom_call.1} parent=31 // pred_check
          %p800 = pneg %p142
        $region54: #{tpu_custom_call.1} parent=31 // pred_check_branch
          %802 = sbr.rel (%p800) target = $region56
        $region55: #{tpu_custom_call.1} parent=31 // pred_region
          %s803 = smul.u32 2, %s32
          %s805 = ssub.s32 512, 512
          %806 = vsyncadd %s791, %s805
          %s807 = smul.addr %s803, 2
          %s808 = smul.addr %s807, 128
          %s809 = scalar_lea.hbm %s3, %s808
          %s810 = sshll.u32 %s794, 4
          %s811 = int_to_ptr.vmem [resolvable:$true] %s810
          %816 = dma.vmem_to_hbm [thread:$0]  %s811, 512, %s809, %s791, 128, 128, 8
        $region56: #{tpu_custom_call.1} parent=31 // pred_fallthru
          _
        // Predicated region
        $region57: #{tpu_custom_call.1} parent=31 // pred_check
          %p817 = pneg %p168
        $region58: #{tpu_custom_call.1} parent=31 // pred_check_branch
          %819 = sbr.rel (%p817) target = $region60
        $region59: #{tpu_custom_call.1} parent=31 // pred_region
          %s820 = smul.u32 2, %s32
          %s822 = ssub.s32 512, 512
          %823 = vsyncadd %s796, %s822
          %s824 = smul.addr %s820, 2
          %s825 = smul.addr %s824, 128
          %s826 = scalar_lea.hbm %s4, %s825
          %s827 = sshll.u32 %s799, 4
          %s828 = int_to_ptr.vmem [resolvable:$true] %s827
          %833 = dma.vmem_to_hbm [thread:$0]  %s828, 512, %s826, %s796, 128, 128, 8
        $region60: #{tpu_custom_call.1} parent=31 // pred_fallthru
          _
      $region32: #{tpu_custom_call.1} parent=5 // pred_fallthru
        _
      %p834 = scmp.le.s32.totalorder 2, %s23
      // Predicated region
      $region61: #{tpu_custom_call.1} parent=5 // pred_check
        %p835 = pneg %p834
      $region62: #{tpu_custom_call.1} parent=5 // pred_check_branch
        %837 = sbr.rel (%p835) target = $region64
      $region63: #{tpu_custom_call.1} parent=5 // pred_region
        %s838 = ssub.s32 %s23, 2
        // Predicated region
        $region65: #{tpu_custom_call.1} parent=63 // pred_check
          %p839 = pneg %p148
        $region66: #{tpu_custom_call.1} parent=63 // pred_check_branch
          %841 = sbr.rel (%p839) target = $region68
        $region67: #{tpu_custom_call.1} parent=63 // pred_region
          %s842 = sand.u32 %s133, 1
          %s843 = scalar_lea.sflag [#allocation5], %s842
          %s844 = sand.u32 %s133, 1
          %s845 = smul.addr %s844, 32
          %s846 = scalar_lea.vmem [#allocation9], %s845
          %847 = dma.done %s843, 512
        $region68: #{tpu_custom_call.1} parent=63 // pred_fallthru
          _
        // Predicated region
        $region69: #{tpu_custom_call.1} parent=63 // pred_check
          %p848 = pneg %p174
        $region70: #{tpu_custom_call.1} parent=63 // pred_check_branch
          %850 = sbr.rel (%p848) target = $region72
        $region71: #{tpu_custom_call.1} parent=63 // pred_region
          %s851 = sand.u32 %s159, 1
          %s852 = scalar_lea.sflag [#allocation11], %s851
          %s853 = sand.u32 %s159, 1
          %s854 = smul.addr %s853, 32
          %s855 = scalar_lea.vmem [#allocation10], %s854
          %856 = dma.done %s852, 512
        $region72: #{tpu_custom_call.1} parent=63 // pred_fallthru
          _
      $region64: #{tpu_custom_call.1} parent=5 // pred_fallthru
        _
    $region6: #{tpu_custom_call.1} parent=1 // loop_footer
      %s27 = sadd.s32 1, %s23
    $region7: #{tpu_custom_call.1} parent=1 // loop_footer_branch
      %22 = sbr.rel target = $region3
    $region8: #{tpu_custom_call.1} parent=1 // loop_exit
      _
    %857 = vsyncpa [#allocation4], 1
    %s858 = scalar_lea.sflag [#allocation4], 1
    %859 = vsyncpa %s858, 1
    %860 = vsyncpa [#allocation7], 1
    %s861 = scalar_lea.sflag [#allocation7], 1
    %862 = vsyncpa %s861, 1
    %863 = vsyncpa [#allocation5], 1
    %s864 = scalar_lea.sflag [#allocation5], 1
    %865 = vsyncpa %s864, 1
    %866 = vsyncpa [#allocation11], 1
    %s867 = scalar_lea.sflag [#allocation11], 1
    %868 = vsyncpa %s867, 1

</llo_original>
